<compile_context>
chip_gen: v5e
topology: v5e:2x2
jax: 0.10.0
libtpu: 0.0.40
codegen_flags: <defaults>
</compile_context>

<pallas_src>
import functools

import jax
import jax.numpy as jnp
from jax.experimental import pallas as pl
from jax.experimental.pallas import tpu as pltpu


def encoder_att_kernel(x_ref, wx_ref, wih_ref, whh_ref, blstm_ref,
                       wout_ref, eout_ref, *, hidden_size, T_minus_1):
    """
    x_ref     : (B, T-1, N)  driving series, PyTorch layout                 VMEM
    wx_ref    : (T-1,)       attn-weight slice acting on the time window    SMEM
    wih_ref   : (N, 4H)      LSTM W_ih^T  (PyTorch gate order i, f, g, o)   VMEM
    whh_ref   : (H, 4H)      LSTM W_hh^T                                    VMEM
    blstm_ref : (1, 4H)      b_ih + b_hh                                    VMEM
    wout_ref  : (B, T-1, N)  weighted inputs (output)                       VMEM
    eout_ref  : (B, T-1, H)  encoded hidden states (output)                 VMEM
    """
    H = hidden_size
    Tm1 = T_minus_1
    B = x_ref.shape[0]

    # ---- attention weights: state- and time-independent (see header) --------
    # score[b, n] = sum_t x[b, t, n] * w_x[t]   (scalar broadcasts from SMEM)
    score = x_ref[:, 0, :] * wx_ref[0]
    for t in range(1, Tm1):
        score = score + x_ref[:, t, :] * wx_ref[t]

    score = score - jnp.max(score, axis=1, keepdims=True)
    e = jnp.exp(score)
    denom = jnp.sum(e, axis=1, keepdims=True)
    # EUP approximate reciprocal + one Newton-Raphson step -> f32-accurate,
    # keeps the divide off the VPU critical path.
    inv = pl.reciprocal(denom, approx=True)
    inv = inv * (2.0 - denom * inv)
    attn = e * inv                                              # (B, N)

    # ---- weighted inputs for every step; single batched writeback -----------
    ws = [attn * x_ref[:, t, :] for t in range(Tm1)]            # each (B, N)
    wout_ref[...] = jnp.stack(ws, axis=1)                       # (B, T-1, N)

    # ---- input-side gate pre-activations, hoisted off the recurrence --------
    blstm = blstm_ref[...]
    wih = wih_ref[...]
    g_in = [jnp.dot(ws[t], wih, preferred_element_type=jnp.float32) + blstm
            for t in range(Tm1)]                                # each (B, 4H)

    # ---- LSTM recurrence (fully unrolled; per-step critical path is one
    #      (B,H)@(H,4H) matmul + full-width EUP sigmoid/tanh + a few VPU ops) --
    whh = whh_ref[...]
    h = jnp.zeros((B, H), jnp.float32)      # init_hidden: zeros
    c = jnp.zeros((B, H), jnp.float32)
    hs = []
    for t in range(Tm1):
        gates = g_in[t] + jnp.dot(h, whh, preferred_element_type=jnp.float32)
        sg = jax.nn.sigmoid(gates)          # one 128-lane EUP pass (i, f, o used)
        tg = jnp.tanh(gates)                # one 128-lane EUP pass (g used)
        i_g = sg[:, 0 * H:1 * H]
        f_g = sg[:, 1 * H:2 * H]
        g_g = tg[:, 2 * H:3 * H]
        o_g = sg[:, 3 * H:4 * H]
        c = f_g * c + i_g * g_g
        h = o_g * jnp.tanh(c)
        hs.append(h)

    eout_ref[...] = jnp.stack(hs, axis=1)                       # (B, T-1, H)


def encoder_att_forward(input_data, params, *, hidden_size, T):
    """input_data: (B, T-1, input_size) float32, as the PyTorch module expects."""
    B, Tm1, N = input_data.shape
    assert Tm1 == T - 1
    H = hidden_size

    w_attn = params["attn_w"]            # (1, 2H + T - 1)
    w_ih = params["w_ih"]                # (4H, N)
    w_hh = params["w_hh"]                # (4H, H)
    b_ih = params["b_ih"]                # (4H,)
    b_hh = params["b_hh"]                # (4H,)

    # w_attn[:, :H] (hidden), w_attn[:, H:2H] (cell) and the attention bias act
    # uniformly across the softmax axis and cancel exactly inside the softmax,
    # so only the time-window slice is needed by the kernel.
    wx = w_attn[0, 2 * H:].astype(jnp.float32)                  # (T-1,)
    wihT = jnp.transpose(w_ih).astype(jnp.float32)              # (N, 4H)
    whhT = jnp.transpose(w_hh).astype(jnp.float32)              # (H, 4H)
    blstm = (b_ih + b_hh).reshape(1, 4 * H).astype(jnp.float32)

    vmem = pl.BlockSpec(memory_space=pltpu.MemorySpace.VMEM)
    smem = pl.BlockSpec(memory_space=pltpu.MemorySpace.SMEM)
    kernel = functools.partial(encoder_att_kernel, hidden_size=H, T_minus_1=Tm1)
    wout, eout = pl.pallas_call(
        kernel,
        out_shape=(jax.ShapeDtypeStruct((B, Tm1, N), jnp.float32),
                   jax.ShapeDtypeStruct((B, Tm1, H), jnp.float32)),
        in_specs=[vmem, smem, vmem, vmem, vmem],
        out_specs=(vmem, vmem),
    )(input_data.astype(jnp.float32), wx, wihT, whhT, blstm)

    # Outputs are already in the PyTorch (B, T-1, N) / (B, T-1, H) layout.
    return wout, eout


def encoder_att_reference(input_data, params, *, hidden_size, T):
    """Pure-JAX literal transcription of the PyTorch forward, for verification."""
    B, Tm1, N = input_data.shape
    H = hidden_size
    w_attn, b_attn = params["attn_w"], params["attn_b"]
    w_ih, w_hh = params["w_ih"], params["w_hh"]
    b_ih, b_hh = params["b_ih"], params["b_hh"]

    h = jnp.zeros((B, H), jnp.float32)
    c = jnp.zeros((B, H), jnp.float32)
    x_perm = jnp.transpose(input_data, (0, 2, 1))                 # (B, N, T-1)
    ws, es = [], []
    for t in range(Tm1):
        h_rep = jnp.broadcast_to(h[:, None, :], (B, N, H))
        c_rep = jnp.broadcast_to(c[:, None, :], (B, N, H))
        cat = jnp.concatenate([h_rep, c_rep, x_perm], axis=2)     # (B, N, 2H+T-1)
        logits = cat.reshape(-1, 2 * H + Tm1) @ w_attn[0] + b_attn[0]
        attn = jax.nn.softmax(logits.reshape(B, N), axis=1)
        weighted = attn * input_data[:, t, :]
        gates = weighted @ w_ih.T + b_ih + h @ w_hh.T + b_hh
        i_g = jax.nn.sigmoid(gates[:, :H])
        f_g = jax.nn.sigmoid(gates[:, H:2 * H])
        g_g = jnp.tanh(gates[:, 2 * H:3 * H])
        o_g = jax.nn.sigmoid(gates[:, 3 * H:])
        c = f_g * c + i_g * g_g
        h = o_g * jnp.tanh(c)
        ws.append(weighted)
        es.append(h)
    return jnp.stack(ws, axis=1), jnp.stack(es, axis=1)


if __name__ == "__main__":
    # Small shapes implied by the module: batch=2, input_size=8, hidden=32, T=8.
    B, N, H, T = 2, 8, 32, 8
    Tm1 = T - 1

    key = jax.random.PRNGKey(0)
    keys = jax.random.split(key, 7)
    params = {
        "attn_w": 0.1 * jax.random.normal(keys[0], (1, 2 * H + Tm1), jnp.float32),
        "attn_b": 0.1 * jax.random.normal(keys[1], (1,), jnp.float32),
        "w_ih": 0.1 * jax.random.normal(keys[2], (4 * H, N), jnp.float32),
        "w_hh": 0.1 * jax.random.normal(keys[3], (4 * H, H), jnp.float32),
        "b_ih": 0.1 * jax.random.normal(keys[4], (4 * H,), jnp.float32),
        "b_hh": 0.1 * jax.random.normal(keys[5], (4 * H,), jnp.float32),
    }
    input_data = jax.random.normal(keys[6], (B, Tm1, N), jnp.float32)

    iw, ie = encoder_att_forward(input_data, params, hidden_size=H, T=T)
    iw, ie = jax.block_until_ready((iw, ie))

    iw_ref, ie_ref = encoder_att_reference(input_data, params, hidden_size=H, T=T)
    assert iw.shape == (B, Tm1, N) and ie.shape == (B, Tm1, H)
    assert jnp.allclose(iw, iw_ref, rtol=2e-5, atol=2e-5)
    assert jnp.allclose(ie, ie_ref, rtol=2e-5, atol=2e-5)

    print("KERNEL_OK")
</pallas_src>

<mosaic_0001>
module attributes {stable_mosaic.version = 11 : i64} {
  func.func @encoder_att_kernel(%arg0: memref<2x7x8xf32, #tpu.memory_space<vmem>>, %arg1: memref<7xf32, #tpu.memory_space<smem>>, %arg2: memref<8x128xf32, #tpu.memory_space<vmem>>, %arg3: memref<32x128xf32, #tpu.memory_space<vmem>>, %arg4: memref<1x128xf32, #tpu.memory_space<vmem>>, %arg5: memref<2x7x8xf32, #tpu.memory_space<vmem>>, %arg6: memref<2x7x32xf32, #tpu.memory_space<vmem>>) attributes {dimension_semantics = [], scalar_prefetch = 0 : i64, scratch_operands = 0 : i64, tpu.core_type = #tpu.core_type<tc>} {
    %c0 = arith.constant 0 : index
    %c0_0 = arith.constant 0 : index
    %c0_1 = arith.constant 0 : index
    %0 = vector.load %arg0[%c0, %c0_0, %c0_1] : memref<2x7x8xf32, #tpu.memory_space<vmem>>, vector<2x1x8xf32>
    %1 = vector.shape_cast %0 : vector<2x1x8xf32> to vector<2x8xf32>
    %c0_2 = arith.constant 0 : index
    %2 = memref.load %arg1[%c0_2] : memref<7xf32, #tpu.memory_space<smem>>
    %3 = vector.broadcast %2 : f32 to vector<2x8xf32>
    %4 = arith.mulf %1, %3 : vector<2x8xf32>
    %c0_3 = arith.constant 0 : index
    %c1 = arith.constant 1 : index
    %c0_4 = arith.constant 0 : index
    %5 = vector.load %arg0[%c0_3, %c1, %c0_4] : memref<2x7x8xf32, #tpu.memory_space<vmem>>, vector<2x1x8xf32>
    %6 = vector.shape_cast %5 : vector<2x1x8xf32> to vector<2x8xf32>
    %c1_5 = arith.constant 1 : index
    %7 = memref.load %arg1[%c1_5] : memref<7xf32, #tpu.memory_space<smem>>
    %8 = vector.broadcast %7 : f32 to vector<2x8xf32>
    %9 = arith.mulf %6, %8 : vector<2x8xf32>
    %10 = arith.addf %4, %9 : vector<2x8xf32>
    %c0_6 = arith.constant 0 : index
    %c2 = arith.constant 2 : index
    %c0_7 = arith.constant 0 : index
    %11 = vector.load %arg0[%c0_6, %c2, %c0_7] : memref<2x7x8xf32, #tpu.memory_space<vmem>>, vector<2x1x8xf32>
    %12 = vector.shape_cast %11 : vector<2x1x8xf32> to vector<2x8xf32>
    %c2_8 = arith.constant 2 : index
    %13 = memref.load %arg1[%c2_8] : memref<7xf32, #tpu.memory_space<smem>>
    %14 = vector.broadcast %13 : f32 to vector<2x8xf32>
    %15 = arith.mulf %12, %14 : vector<2x8xf32>
    %16 = arith.addf %10, %15 : vector<2x8xf32>
    %c0_9 = arith.constant 0 : index
    %c3 = arith.constant 3 : index
    %c0_10 = arith.constant 0 : index
    %17 = vector.load %arg0[%c0_9, %c3, %c0_10] : memref<2x7x8xf32, #tpu.memory_space<vmem>>, vector<2x1x8xf32>
    %18 = vector.shape_cast %17 : vector<2x1x8xf32> to vector<2x8xf32>
    %c3_11 = arith.constant 3 : index
    %19 = memref.load %arg1[%c3_11] : memref<7xf32, #tpu.memory_space<smem>>
    %20 = vector.broadcast %19 : f32 to vector<2x8xf32>
    %21 = arith.mulf %18, %20 : vector<2x8xf32>
    %22 = arith.addf %16, %21 : vector<2x8xf32>
    %c0_12 = arith.constant 0 : index
    %c4 = arith.constant 4 : index
    %c0_13 = arith.constant 0 : index
    %23 = vector.load %arg0[%c0_12, %c4, %c0_13] : memref<2x7x8xf32, #tpu.memory_space<vmem>>, vector<2x1x8xf32>
    %24 = vector.shape_cast %23 : vector<2x1x8xf32> to vector<2x8xf32>
    %c4_14 = arith.constant 4 : index
    %25 = memref.load %arg1[%c4_14] : memref<7xf32, #tpu.memory_space<smem>>
    %26 = vector.broadcast %25 : f32 to vector<2x8xf32>
    %27 = arith.mulf %24, %26 : vector<2x8xf32>
    %28 = arith.addf %22, %27 : vector<2x8xf32>
    %c0_15 = arith.constant 0 : index
    %c5 = arith.constant 5 : index
    %c0_16 = arith.constant 0 : index
    %29 = vector.load %arg0[%c0_15, %c5, %c0_16] : memref<2x7x8xf32, #tpu.memory_space<vmem>>, vector<2x1x8xf32>
    %30 = vector.shape_cast %29 : vector<2x1x8xf32> to vector<2x8xf32>
    %c5_17 = arith.constant 5 : index
    %31 = memref.load %arg1[%c5_17] : memref<7xf32, #tpu.memory_space<smem>>
    %32 = vector.broadcast %31 : f32 to vector<2x8xf32>
    %33 = arith.mulf %30, %32 : vector<2x8xf32>
    %34 = arith.addf %28, %33 : vector<2x8xf32>
    %c0_18 = arith.constant 0 : index
    %c6 = arith.constant 6 : index
    %c0_19 = arith.constant 0 : index
    %35 = vector.load %arg0[%c0_18, %c6, %c0_19] : memref<2x7x8xf32, #tpu.memory_space<vmem>>, vector<2x1x8xf32>
    %36 = vector.shape_cast %35 : vector<2x1x8xf32> to vector<2x8xf32>
    %c6_20 = arith.constant 6 : index
    %37 = memref.load %arg1[%c6_20] : memref<7xf32, #tpu.memory_space<smem>>
    %38 = vector.broadcast %37 : f32 to vector<2x8xf32>
    %39 = arith.mulf %36, %38 : vector<2x8xf32>
    %40 = arith.addf %34, %39 : vector<2x8xf32>
    %cst = arith.constant dense<0xFF800000> : vector<2xf32>
    %41 = vector.multi_reduction <maximumf>, %40, %cst [1] : vector<2x8xf32> to vector<2xf32>
    %42 = vector.shape_cast %41 : vector<2xf32> to vector<2x1xf32>
    %43 = vector.broadcast %42 : vector<2x1xf32> to vector<2x8xf32>
    %44 = arith.subf %40, %43 : vector<2x8xf32>
    %45 = math.exp %44 : vector<2x8xf32>
    %cst_21 = arith.constant dense<0.000000e+00> : vector<2xf32>
    %46 = vector.multi_reduction <add>, %45, %cst_21 [1] : vector<2x8xf32> to vector<2xf32>
    %47 = vector.shape_cast %46 : vector<2xf32> to vector<2x1xf32>
    %48 = tpu.reciprocal %47 {approx = true} : vector<2x1xf32> -> vector<2x1xf32>
    %49 = arith.mulf %47, %48 : vector<2x1xf32>
    %cst_22 = arith.constant 2.000000e+00 : f32
    %50 = vector.broadcast %cst_22 : f32 to vector<2x1xf32>
    %51 = arith.subf %50, %49 : vector<2x1xf32>
    %52 = arith.mulf %48, %51 : vector<2x1xf32>
    %53 = vector.broadcast %52 : vector<2x1xf32> to vector<2x8xf32>
    %54 = arith.mulf %45, %53 : vector<2x8xf32>
    %c0_23 = arith.constant 0 : index
    %c0_24 = arith.constant 0 : index
    %c0_25 = arith.constant 0 : index
    %55 = vector.load %arg0[%c0_23, %c0_24, %c0_25] : memref<2x7x8xf32, #tpu.memory_space<vmem>>, vector<2x1x8xf32>
    %56 = vector.shape_cast %55 : vector<2x1x8xf32> to vector<2x8xf32>
    %57 = arith.mulf %54, %56 : vector<2x8xf32>
    %c0_26 = arith.constant 0 : index
    %c1_27 = arith.constant 1 : index
    %c0_28 = arith.constant 0 : index
    %58 = vector.load %arg0[%c0_26, %c1_27, %c0_28] : memref<2x7x8xf32, #tpu.memory_space<vmem>>, vector<2x1x8xf32>
    %59 = vector.shape_cast %58 : vector<2x1x8xf32> to vector<2x8xf32>
    %60 = arith.mulf %54, %59 : vector<2x8xf32>
    %c0_29 = arith.constant 0 : index
    %c2_30 = arith.constant 2 : index
    %c0_31 = arith.constant 0 : index
    %61 = vector.load %arg0[%c0_29, %c2_30, %c0_31] : memref<2x7x8xf32, #tpu.memory_space<vmem>>, vector<2x1x8xf32>
    %62 = vector.shape_cast %61 : vector<2x1x8xf32> to vector<2x8xf32>
    %63 = arith.mulf %54, %62 : vector<2x8xf32>
    %c0_32 = arith.constant 0 : index
    %c3_33 = arith.constant 3 : index
    %c0_34 = arith.constant 0 : index
    %64 = vector.load %arg0[%c0_32, %c3_33, %c0_34] : memref<2x7x8xf32, #tpu.memory_space<vmem>>, vector<2x1x8xf32>
    %65 = vector.shape_cast %64 : vector<2x1x8xf32> to vector<2x8xf32>
    %66 = arith.mulf %54, %65 : vector<2x8xf32>
    %c0_35 = arith.constant 0 : index
    %c4_36 = arith.constant 4 : index
    %c0_37 = arith.constant 0 : index
    %67 = vector.load %arg0[%c0_35, %c4_36, %c0_37] : memref<2x7x8xf32, #tpu.memory_space<vmem>>, vector<2x1x8xf32>
    %68 = vector.shape_cast %67 : vector<2x1x8xf32> to vector<2x8xf32>
    %69 = arith.mulf %54, %68 : vector<2x8xf32>
    %c0_38 = arith.constant 0 : index
    %c5_39 = arith.constant 5 : index
    %c0_40 = arith.constant 0 : index
    %70 = vector.load %arg0[%c0_38, %c5_39, %c0_40] : memref<2x7x8xf32, #tpu.memory_space<vmem>>, vector<2x1x8xf32>
    %71 = vector.shape_cast %70 : vector<2x1x8xf32> to vector<2x8xf32>
    %72 = arith.mulf %54, %71 : vector<2x8xf32>
    %c0_41 = arith.constant 0 : index
    %c6_42 = arith.constant 6 : index
    %c0_43 = arith.constant 0 : index
    %73 = vector.load %arg0[%c0_41, %c6_42, %c0_43] : memref<2x7x8xf32, #tpu.memory_space<vmem>>, vector<2x1x8xf32>
    %74 = vector.shape_cast %73 : vector<2x1x8xf32> to vector<2x8xf32>
    %75 = arith.mulf %54, %74 : vector<2x8xf32>
    %76 = vector.shape_cast %57 : vector<2x8xf32> to vector<2x1x8xf32>
    %77 = vector.shape_cast %60 : vector<2x8xf32> to vector<2x1x8xf32>
    %78 = vector.shape_cast %63 : vector<2x8xf32> to vector<2x1x8xf32>
    %79 = vector.shape_cast %66 : vector<2x8xf32> to vector<2x1x8xf32>
    %80 = vector.shape_cast %69 : vector<2x8xf32> to vector<2x1x8xf32>
    %81 = vector.shape_cast %72 : vector<2x8xf32> to vector<2x1x8xf32>
    %82 = vector.shape_cast %75 : vector<2x8xf32> to vector<2x1x8xf32>
    %83 = tpu.concatenate %76, %77, %78, %79, %80, %81, %82 in 1 : vector<2x1x8xf32>, vector<2x1x8xf32>, vector<2x1x8xf32>, vector<2x1x8xf32>, vector<2x1x8xf32>, vector<2x1x8xf32>, vector<2x1x8xf32> -> vector<2x7x8xf32>
    %c0_44 = arith.constant 0 : index
    %c0_45 = arith.constant 0 : index
    %c0_46 = arith.constant 0 : index
    %84 = vector.load %arg5[%c0_44, %c0_45, %c0_46] : memref<2x7x8xf32, #tpu.memory_space<vmem>>, vector<2x7x8xf32>
    tpu.vector_store %arg5[%c0_44, %c0_45, %c0_46], %83 {strides = array<i32>} : memref<2x7x8xf32, #tpu.memory_space<vmem>>, vector<2x7x8xf32>,
    %c0_47 = arith.constant 0 : index
    %c0_48 = arith.constant 0 : index
    %85 = vector.load %arg4[%c0_47, %c0_48] : memref<1x128xf32, #tpu.memory_space<vmem>>, vector<1x128xf32>
    %c0_49 = arith.constant 0 : index
    %c0_50 = arith.constant 0 : index
    %86 = vector.load %arg2[%c0_49, %c0_50] : memref<8x128xf32, #tpu.memory_space<vmem>>, vector<8x128xf32>
    %cst_51 = arith.constant dense<0.000000e+00> : vector<2x128xf32>
    %87 = tpu.matmul %57, %86, %cst_51 {dimension_numbers = #tpu.dot_dimension_numbers<[1], [0], [0], [1], [0, 0, 1, 1], [], []>} : vector<2x8xf32>, vector<8x128xf32>, vector<2x128xf32> -> vector<2x128xf32>
    %88 = vector.broadcast %85 : vector<1x128xf32> to vector<2x128xf32>
    %89 = arith.addf %87, %88 : vector<2x128xf32>
    %cst_52 = arith.constant dense<0.000000e+00> : vector<2x128xf32>
    %90 = tpu.matmul %60, %86, %cst_52 {dimension_numbers = #tpu.dot_dimension_numbers<[1], [0], [0], [1], [0, 0, 1, 1], [], []>} : vector<2x8xf32>, vector<8x128xf32>, vector<2x128xf32> -> vector<2x128xf32>
    %91 = vector.broadcast %85 : vector<1x128xf32> to vector<2x128xf32>
    %92 = arith.addf %90, %91 : vector<2x128xf32>
    %cst_53 = arith.constant dense<0.000000e+00> : vector<2x128xf32>
    %93 = tpu.matmul %63, %86, %cst_53 {dimension_numbers = #tpu.dot_dimension_numbers<[1], [0], [0], [1], [0, 0, 1, 1], [], []>} : vector<2x8xf32>, vector<8x128xf32>, vector<2x128xf32> -> vector<2x128xf32>
    %94 = vector.broadcast %85 : vector<1x128xf32> to vector<2x128xf32>
    %95 = arith.addf %93, %94 : vector<2x128xf32>
    %cst_54 = arith.constant dense<0.000000e+00> : vector<2x128xf32>
    %96 = tpu.matmul %66, %86, %cst_54 {dimension_numbers = #tpu.dot_dimension_numbers<[1], [0], [0], [1], [0, 0, 1, 1], [], []>} : vector<2x8xf32>, vector<8x128xf32>, vector<2x128xf32> -> vector<2x128xf32>
    %97 = vector.broadcast %85 : vector<1x128xf32> to vector<2x128xf32>
    %98 = arith.addf %96, %97 : vector<2x128xf32>
    %cst_55 = arith.constant dense<0.000000e+00> : vector<2x128xf32>
    %99 = tpu.matmul %69, %86, %cst_55 {dimension_numbers = #tpu.dot_dimension_numbers<[1], [0], [0], [1], [0, 0, 1, 1], [], []>} : vector<2x8xf32>, vector<8x128xf32>, vector<2x128xf32> -> vector<2x128xf32>
    %100 = vector.broadcast %85 : vector<1x128xf32> to vector<2x128xf32>
    %101 = arith.addf %99, %100 : vector<2x128xf32>
    %cst_56 = arith.constant dense<0.000000e+00> : vector<2x128xf32>
    %102 = tpu.matmul %72, %86, %cst_56 {dimension_numbers = #tpu.dot_dimension_numbers<[1], [0], [0], [1], [0, 0, 1, 1], [], []>} : vector<2x8xf32>, vector<8x128xf32>, vector<2x128xf32> -> vector<2x128xf32>
    %103 = vector.broadcast %85 : vector<1x128xf32> to vector<2x128xf32>
    %104 = arith.addf %102, %103 : vector<2x128xf32>
    %cst_57 = arith.constant dense<0.000000e+00> : vector<2x128xf32>
    %105 = tpu.matmul %75, %86, %cst_57 {dimension_numbers = #tpu.dot_dimension_numbers<[1], [0], [0], [1], [0, 0, 1, 1], [], []>} : vector<2x8xf32>, vector<8x128xf32>, vector<2x128xf32> -> vector<2x128xf32>
    %106 = vector.broadcast %85 : vector<1x128xf32> to vector<2x128xf32>
    %107 = arith.addf %105, %106 : vector<2x128xf32>
    %c0_58 = arith.constant 0 : index
    %c0_59 = arith.constant 0 : index
    %108 = vector.load %arg3[%c0_58, %c0_59] : memref<32x128xf32, #tpu.memory_space<vmem>>, vector<32x128xf32>
    %cst_60 = arith.constant 0.000000e+00 : f32
    %109 = vector.broadcast %cst_60 : f32 to vector<2x32xf32>
    %cst_61 = arith.constant 0.000000e+00 : f32
    %110 = vector.broadcast %cst_61 : f32 to vector<2x32xf32>
    %cst_62 = arith.constant dense<0.000000e+00> : vector<2x128xf32>
    %111 = tpu.matmul %109, %108, %cst_62 {dimension_numbers = #tpu.dot_dimension_numbers<[1], [0], [0], [1], [0, 0, 1, 1], [], []>} : vector<2x32xf32>, vector<32x128xf32>, vector<2x128xf32> -> vector<2x128xf32>
    %112 = arith.addf %89, %111 : vector<2x128xf32>
    %113 = arith.negf %112 : vector<2x128xf32>
    %114 = math.exp %113 : vector<2x128xf32>
    %cst_63 = arith.constant 1.000000e+00 : f32
    %115 = vector.broadcast %cst_63 : f32 to vector<2x128xf32>
    %116 = arith.addf %115, %114 : vector<2x128xf32>
    %117 = arith.divf %115, %116 : vector<2x128xf32>
    %118 = math.tanh %112 : vector<2x128xf32>
    %119 = vector.extract_strided_slice %117 {offsets = [0, 0], sizes = [2, 32], strides = [1, 1]} : vector<2x128xf32> to vector<2x32xf32>
    %120 = vector.extract_strided_slice %117 {offsets = [0, 32], sizes = [2, 32], strides = [1, 1]} : vector<2x128xf32> to vector<2x32xf32>
    %121 = vector.extract_strided_slice %118 {offsets = [0, 64], sizes = [2, 32], strides = [1, 1]} : vector<2x128xf32> to vector<2x32xf32>
    %122 = vector.extract_strided_slice %117 {offsets = [0, 96], sizes = [2, 32], strides = [1, 1]} : vector<2x128xf32> to vector<2x32xf32>
    %123 = arith.mulf %120, %110 : vector<2x32xf32>
    %124 = arith.mulf %119, %121 : vector<2x32xf32>
    %125 = arith.addf %123, %124 : vector<2x32xf32>
    %126 = math.tanh %125 : vector<2x32xf32>
    %127 = arith.mulf %122, %126 : vector<2x32xf32>
    %cst_64 = arith.constant dense<0.000000e+00> : vector<2x128xf32>
    %128 = tpu.matmul %127, %108, %cst_64 {dimension_numbers = #tpu.dot_dimension_numbers<[1], [0], [0], [1], [0, 0, 1, 1], [], []>} : vector<2x32xf32>, vector<32x128xf32>, vector<2x128xf32> -> vector<2x128xf32>
    %129 = arith.addf %92, %128 : vector<2x128xf32>
    %130 = arith.negf %129 : vector<2x128xf32>
    %131 = math.exp %130 : vector<2x128xf32>
    %cst_65 = arith.constant 1.000000e+00 : f32
    %132 = vector.broadcast %cst_65 : f32 to vector<2x128xf32>
    %133 = arith.addf %132, %131 : vector<2x128xf32>
    %134 = arith.divf %132, %133 : vector<2x128xf32>
    %135 = math.tanh %129 : vector<2x128xf32>
    %136 = vector.extract_strided_slice %134 {offsets = [0, 0], sizes = [2, 32], strides = [1, 1]} : vector<2x128xf32> to vector<2x32xf32>
    %137 = vector.extract_strided_slice %134 {offsets = [0, 32], sizes = [2, 32], strides = [1, 1]} : vector<2x128xf32> to vector<2x32xf32>
    %138 = vector.extract_strided_slice %135 {offsets = [0, 64], sizes = [2, 32], strides = [1, 1]} : vector<2x128xf32> to vector<2x32xf32>
    %139 = vector.extract_strided_slice %134 {offsets = [0, 96], sizes = [2, 32], strides = [1, 1]} : vector<2x128xf32> to vector<2x32xf32>
    %140 = arith.mulf %137, %125 : vector<2x32xf32>
    %141 = arith.mulf %136, %138 : vector<2x32xf32>
    %142 = arith.addf %140, %141 : vector<2x32xf32>
    %143 = math.tanh %142 : vector<2x32xf32>
    %144 = arith.mulf %139, %143 : vector<2x32xf32>
    %cst_66 = arith.constant dense<0.000000e+00> : vector<2x128xf32>
    %145 = tpu.matmul %144, %108, %cst_66 {dimension_numbers = #tpu.dot_dimension_numbers<[1], [0], [0], [1], [0, 0, 1, 1], [], []>} : vector<2x32xf32>, vector<32x128xf32>, vector<2x128xf32> -> vector<2x128xf32>
    %146 = arith.addf %95, %145 : vector<2x128xf32>
    %147 = arith.negf %146 : vector<2x128xf32>
    %148 = math.exp %147 : vector<2x128xf32>
    %cst_67 = arith.constant 1.000000e+00 : f32
    %149 = vector.broadcast %cst_67 : f32 to vector<2x128xf32>
    %150 = arith.addf %149, %148 : vector<2x128xf32>
    %151 = arith.divf %149, %150 : vector<2x128xf32>
    %152 = math.tanh %146 : vector<2x128xf32>
    %153 = vector.extract_strided_slice %151 {offsets = [0, 0], sizes = [2, 32], strides = [1, 1]} : vector<2x128xf32> to vector<2x32xf32>
    %154 = vector.extract_strided_slice %151 {offsets = [0, 32], sizes = [2, 32], strides = [1, 1]} : vector<2x128xf32> to vector<2x32xf32>
    %155 = vector.extract_strided_slice %152 {offsets = [0, 64], sizes = [2, 32], strides = [1, 1]} : vector<2x128xf32> to vector<2x32xf32>
    %156 = vector.extract_strided_slice %151 {offsets = [0, 96], sizes = [2, 32], strides = [1, 1]} : vector<2x128xf32> to vector<2x32xf32>
    %157 = arith.mulf %154, %142 : vector<2x32xf32>
    %158 = arith.mulf %153, %155 : vector<2x32xf32>
    %159 = arith.addf %157, %158 : vector<2x32xf32>
    %160 = math.tanh %159 : vector<2x32xf32>
    %161 = arith.mulf %156, %160 : vector<2x32xf32>
    %cst_68 = arith.constant dense<0.000000e+00> : vector<2x128xf32>
    %162 = tpu.matmul %161, %108, %cst_68 {dimension_numbers = #tpu.dot_dimension_numbers<[1], [0], [0], [1], [0, 0, 1, 1], [], []>} : vector<2x32xf32>, vector<32x128xf32>, vector<2x128xf32> -> vector<2x128xf32>
    %163 = arith.addf %98, %162 : vector<2x128xf32>
    %164 = arith.negf %163 : vector<2x128xf32>
    %165 = math.exp %164 : vector<2x128xf32>
    %cst_69 = arith.constant 1.000000e+00 : f32
    %166 = vector.broadcast %cst_69 : f32 to vector<2x128xf32>
    %167 = arith.addf %166, %165 : vector<2x128xf32>
    %168 = arith.divf %166, %167 : vector<2x128xf32>
    %169 = math.tanh %163 : vector<2x128xf32>
    %170 = vector.extract_strided_slice %168 {offsets = [0, 0], sizes = [2, 32], strides = [1, 1]} : vector<2x128xf32> to vector<2x32xf32>
    %171 = vector.extract_strided_slice %168 {offsets = [0, 32], sizes = [2, 32], strides = [1, 1]} : vector<2x128xf32> to vector<2x32xf32>
    %172 = vector.extract_strided_slice %169 {offsets = [0, 64], sizes = [2, 32], strides = [1, 1]} : vector<2x128xf32> to vector<2x32xf32>
    %173 = vector.extract_strided_slice %168 {offsets = [0, 96], sizes = [2, 32], strides = [1, 1]} : vector<2x128xf32> to vector<2x32xf32>
    %174 = arith.mulf %171, %159 : vector<2x32xf32>
    %175 = arith.mulf %170, %172 : vector<2x32xf32>
    %176 = arith.addf %174, %175 : vector<2x32xf32>
    %177 = math.tanh %176 : vector<2x32xf32>
    %178 = arith.mulf %173, %177 : vector<2x32xf32>
    %cst_70 = arith.constant dense<0.000000e+00> : vector<2x128xf32>
    %179 = tpu.matmul %178, %108, %cst_70 {dimension_numbers = #tpu.dot_dimension_numbers<[1], [0], [0], [1], [0, 0, 1, 1], [], []>} : vector<2x32xf32>, vector<32x128xf32>, vector<2x128xf32> -> vector<2x128xf32>
    %180 = arith.addf %101, %179 : vector<2x128xf32>
    %181 = arith.negf %180 : vector<2x128xf32>
    %182 = math.exp %181 : vector<2x128xf32>
    %cst_71 = arith.constant 1.000000e+00 : f32
    %183 = vector.broadcast %cst_71 : f32 to vector<2x128xf32>
    %184 = arith.addf %183, %182 : vector<2x128xf32>
    %185 = arith.divf %183, %184 : vector<2x128xf32>
    %186 = math.tanh %180 : vector<2x128xf32>
    %187 = vector.extract_strided_slice %185 {offsets = [0, 0], sizes = [2, 32], strides = [1, 1]} : vector<2x128xf32> to vector<2x32xf32>
    %188 = vector.extract_strided_slice %185 {offsets = [0, 32], sizes = [2, 32], strides = [1, 1]} : vector<2x128xf32> to vector<2x32xf32>
    %189 = vector.extract_strided_slice %186 {offsets = [0, 64], sizes = [2, 32], strides = [1, 1]} : vector<2x128xf32> to vector<2x32xf32>
    %190 = vector.extract_strided_slice %185 {offsets = [0, 96], sizes = [2, 32], strides = [1, 1]} : vector<2x128xf32> to vector<2x32xf32>
    %191 = arith.mulf %188, %176 : vector<2x32xf32>
    %192 = arith.mulf %187, %189 : vector<2x32xf32>
    %193 = arith.addf %191, %192 : vector<2x32xf32>
    %194 = math.tanh %193 : vector<2x32xf32>
    %195 = arith.mulf %190, %194 : vector<2x32xf32>
    %cst_72 = arith.constant dense<0.000000e+00> : vector<2x128xf32>
    %196 = tpu.matmul %195, %108, %cst_72 {dimension_numbers = #tpu.dot_dimension_numbers<[1], [0], [0], [1], [0, 0, 1, 1], [], []>} : vector<2x32xf32>, vector<32x128xf32>, vector<2x128xf32> -> vector<2x128xf32>
    %197 = arith.addf %104, %196 : vector<2x128xf32>
    %198 = arith.negf %197 : vector<2x128xf32>
    %199 = math.exp %198 : vector<2x128xf32>
    %cst_73 = arith.constant 1.000000e+00 : f32
    %200 = vector.broadcast %cst_73 : f32 to vector<2x128xf32>
    %201 = arith.addf %200, %199 : vector<2x128xf32>
    %202 = arith.divf %200, %201 : vector<2x128xf32>
    %203 = math.tanh %197 : vector<2x128xf32>
    %204 = vector.extract_strided_slice %202 {offsets = [0, 0], sizes = [2, 32], strides = [1, 1]} : vector<2x128xf32> to vector<2x32xf32>
    %205 = vector.extract_strided_slice %202 {offsets = [0, 32], sizes = [2, 32], strides = [1, 1]} : vector<2x128xf32> to vector<2x32xf32>
    %206 = vector.extract_strided_slice %203 {offsets = [0, 64], sizes = [2, 32], strides = [1, 1]} : vector<2x128xf32> to vector<2x32xf32>
    %207 = vector.extract_strided_slice %202 {offsets = [0, 96], sizes = [2, 32], strides = [1, 1]} : vector<2x128xf32> to vector<2x32xf32>
    %208 = arith.mulf %205, %193 : vector<2x32xf32>
    %209 = arith.mulf %204, %206 : vector<2x32xf32>
    %210 = arith.addf %208, %209 : vector<2x32xf32>
    %211 = math.tanh %210 : vector<2x32xf32>
    %212 = arith.mulf %207, %211 : vector<2x32xf32>
    %cst_74 = arith.constant dense<0.000000e+00> : vector<2x128xf32>
    %213 = tpu.matmul %212, %108, %cst_74 {dimension_numbers = #tpu.dot_dimension_numbers<[1], [0], [0], [1], [0, 0, 1, 1], [], []>} : vector<2x32xf32>, vector<32x128xf32>, vector<2x128xf32> -> vector<2x128xf32>
    %214 = arith.addf %107, %213 : vector<2x128xf32>
    %215 = arith.negf %214 : vector<2x128xf32>
    %216 = math.exp %215 : vector<2x128xf32>
    %cst_75 = arith.constant 1.000000e+00 : f32
    %217 = vector.broadcast %cst_75 : f32 to vector<2x128xf32>
    %218 = arith.addf %217, %216 : vector<2x128xf32>
    %219 = arith.divf %217, %218 : vector<2x128xf32>
    %220 = math.tanh %214 : vector<2x128xf32>
    %221 = vector.extract_strided_slice %219 {offsets = [0, 0], sizes = [2, 32], strides = [1, 1]} : vector<2x128xf32> to vector<2x32xf32>
    %222 = vector.extract_strided_slice %219 {offsets = [0, 32], sizes = [2, 32], strides = [1, 1]} : vector<2x128xf32> to vector<2x32xf32>
    %223 = vector.extract_strided_slice %220 {offsets = [0, 64], sizes = [2, 32], strides = [1, 1]} : vector<2x128xf32> to vector<2x32xf32>
    %224 = vector.extract_strided_slice %219 {offsets = [0, 96], sizes = [2, 32], strides = [1, 1]} : vector<2x128xf32> to vector<2x32xf32>
    %225 = arith.mulf %222, %210 : vector<2x32xf32>
    %226 = arith.mulf %221, %223 : vector<2x32xf32>
    %227 = arith.addf %225, %226 : vector<2x32xf32>
    %228 = math.tanh %227 : vector<2x32xf32>
    %229 = arith.mulf %224, %228 : vector<2x32xf32>
    %230 = vector.shape_cast %127 : vector<2x32xf32> to vector<2x1x32xf32>
    %231 = vector.shape_cast %144 : vector<2x32xf32> to vector<2x1x32xf32>
    %232 = vector.shape_cast %161 : vector<2x32xf32> to vector<2x1x32xf32>
    %233 = vector.shape_cast %178 : vector<2x32xf32> to vector<2x1x32xf32>
    %234 = vector.shape_cast %195 : vector<2x32xf32> to vector<2x1x32xf32>
    %235 = vector.shape_cast %212 : vector<2x32xf32> to vector<2x1x32xf32>
    %236 = vector.shape_cast %229 : vector<2x32xf32> to vector<2x1x32xf32>
    %237 = tpu.concatenate %230, %231, %232, %233, %234, %235, %236 in 1 : vector<2x1x32xf32>, vector<2x1x32xf32>, vector<2x1x32xf32>, vector<2x1x32xf32>, vector<2x1x32xf32>, vector<2x1x32xf32>, vector<2x1x32xf32> -> vector<2x7x32xf32>
    %c0_76 = arith.constant 0 : index
    %c0_77 = arith.constant 0 : index
    %c0_78 = arith.constant 0 : index
    %238 = vector.load %arg6[%c0_76, %c0_77, %c0_78] : memref<2x7x32xf32, #tpu.memory_space<vmem>>, vector<2x7x32xf32>
    tpu.vector_store %arg6[%c0_76, %c0_77, %c0_78], %237 {strides = array<i32>} : memref<2x7x32xf32, #tpu.memory_space<vmem>>, vector<2x7x32xf32>,
    return
  }
}

</mosaic_0001>

<llo_original>
// kernel: tpu_custom_call.1
$region0: #{tpu_custom_call.1}
  #allocation0 [shape = 'u32[]', space=smem, size = 0x4, offset = 0x4, fixed_abs, tag = 'smem constant byte address 0x4 - core index']
  #allocation1 [shape = 'u32[72,128]{1,0:T(1,128)}', space=vmem, size = 0x9000, scoped, tag = 'internal scratch']
  %s0 = inlined_call_operand.vmem [shape: f32[2,7,8], index: 0, kind: input, shape index: {}]
  %s1 = inlined_call_operand.hbm [shape: f32[7], index: 1, kind: input, shape index: {}]
  %s2 = inlined_call_operand.hbm [shape: f32[8,128], index: 2, kind: input, shape index: {}]
  %s3 = inlined_call_operand.vmem [shape: f32[32,128], index: 3, kind: input, shape index: {}]
  %s4 = inlined_call_operand.vmem [shape: f32[1,128], index: 4, kind: input, shape index: {}]
  %s5 = inlined_call_operand.vmem [shape: f32[2,7,8], index: 5, kind: output, shape index: {0}]
  %s6 = inlined_call_operand.vmem [shape: f32[2,7,32], index: 6, kind: output, shape index: {1}]
  %7 = xla_tuple %s5, %s6
  %s8 = sld [smem:[#allocation0]]
  $region46: #{tpu_custom_call.1} parent=0
    _
  %s10 = ssub.s32 1, %s8
  %s11 = scalar_select 0, %s10, %s8
  $region1: #{tpu_custom_call.1} parent=0
    #allocation2 [shape = 'u8[512]{0}', space=smem, size = 0x200, scoped, tag = 'input window, operand 1, single buffered']
    #allocation3 [shape = 's32[1]{0}', space=sflag, size = 0x4, scoped, tag = 'scoped memory for tpu_custom_call.1']
    #allocation4 [shape = 's32[1]{0}', space=sflag, size = 0x4, scoped, tag = 'scoped memory for tpu_custom_call.1']
    #allocation5 [shape = 'u8[4096]{0}', space=vmem, size = 0x1000, scoped, tag = 'input window, operand 2, single buffered']
    %12 = vsyncpa [#allocation4], 0
    %13 = vsyncpa [#allocation3], 0
    // Predicated region
    $region2: #{tpu_custom_call.1} parent=1 // pred_check
      _
    $region3: #{tpu_custom_call.1} parent=1 // pred_check_branch
      %15 = sbr.rel (0) target = $region5
    $region4: #{tpu_custom_call.1} parent=1 // pred_region
      _
    $region5: #{tpu_custom_call.1} parent=1 // pred_fallthru
      _
    // Predicated region
    $region6: #{tpu_custom_call.1} parent=1 // pred_check
      _
    $region7: #{tpu_custom_call.1} parent=1 // pred_check_branch
      %17 = sbr.rel (0) target = $region9
    $region8: #{tpu_custom_call.1} parent=1 // pred_region
      %19 = vsyncadd [#allocation4], 0
      %s21 = sshll.u32 %s1, 4
      %s22 = int_to_ptr.hbm [resolvable:$true] %s21
      %24 = dma.hbm_to_smem %s22, 16, [#allocation2], [#allocation4]
    $region9: #{tpu_custom_call.1} parent=1 // pred_fallthru
      _
    // Predicated region
    $region10: #{tpu_custom_call.1} parent=1 // pred_check
      _
    $region11: #{tpu_custom_call.1} parent=1 // pred_check_branch
      %26 = sbr.rel (0) target = $region13
    $region12: #{tpu_custom_call.1} parent=1 // pred_region
      %28 = vsyncadd [#allocation3], 0
      %s30 = sshll.u32 %s2, 4
      %s31 = int_to_ptr.hbm [resolvable:$true] %s30
      %s32 = sshll.u32 [#allocation5], 4
      %s33 = int_to_ptr.vmem [resolvable:$true] %s32
      %35 = dma.hbm_to_vmem [thread:$0]  %s31, 128, %s33, [#allocation3]
    $region13: #{tpu_custom_call.1} parent=1 // pred_fallthru
      _
    // Predicated region
    $region14: #{tpu_custom_call.1} parent=1 // pred_check
      _
    $region15: #{tpu_custom_call.1} parent=1 // pred_check_branch
      %37 = sbr.rel (0) target = $region17
    $region16: #{tpu_custom_call.1} parent=1 // pred_region
      _
    $region17: #{tpu_custom_call.1} parent=1 // pred_fallthru
      _
    // Predicated region
    $region18: #{tpu_custom_call.1} parent=1 // pred_check
      _
    $region19: #{tpu_custom_call.1} parent=1 // pred_check_branch
      %39 = sbr.rel (0) target = $region21
    $region20: #{tpu_custom_call.1} parent=1 // pred_region
      _
    $region21: #{tpu_custom_call.1} parent=1 // pred_fallthru
      _
    // Predicated region
    $region22: #{tpu_custom_call.1} parent=1 // pred_check
      _
    $region23: #{tpu_custom_call.1} parent=1 // pred_check_branch
      %41 = sbr.rel (0) target = $region25
    $region24: #{tpu_custom_call.1} parent=1 // pred_region
      %43 = dma.done [#allocation4], 16
    $region25: #{tpu_custom_call.1} parent=1 // pred_fallthru
      _
    // Predicated region
    $region26: #{tpu_custom_call.1} parent=1 // pred_check
      _
    $region27: #{tpu_custom_call.1} parent=1 // pred_check_branch
      %45 = sbr.rel (0) target = $region29
    $region28: #{tpu_custom_call.1} parent=1 // pred_region
      %47 = dma.done [#allocation3], 128
    $region29: #{tpu_custom_call.1} parent=1 // pred_fallthru
      _
    %48 = sfence
    %v49 = vld [vmem:[%s0] sm:$0x1]
    %v50 = vld [vmem:[%s0 + $0x8] sm:$0x1]
    %s51 = sld [smem:[#allocation2]]
    %v52 = vstv %s51
    %v53 = vmul.f32 %v49, %v52
    %v54 = vmul.f32 %v50, %v52
    %v55 = vld [vmem:[%s0 + $0x1] sm:$0x1]
    %v56 = vld [vmem:[%s0 + $0x9] sm:$0x1]
    %s57 = sld [smem:[#allocation2 + $0x1]]
    %v58 = vstv %s57
    %v59 = vmul.f32 %v55, %v58
    %v60 = vmul.f32 %v56, %v58
    %v61 = vadd.f32 %v53, %v59
    %v62 = vadd.f32 %v54, %v60
    %v63 = vld [vmem:[%s0 + $0x2] sm:$0x1]
    %v64 = vld [vmem:[%s0 + $0xa] sm:$0x1]
    %s65 = sld [smem:[#allocation2 + $0x2]]
    %v66 = vstv %s65
    %v67 = vmul.f32 %v63, %v66
    %v68 = vmul.f32 %v64, %v66
    %v69 = vadd.f32 %v61, %v67
    %v70 = vadd.f32 %v62, %v68
    %v71 = vld [vmem:[%s0 + $0x3] sm:$0x1]
    %v72 = vld [vmem:[%s0 + $0xb] sm:$0x1]
    %s73 = sld [smem:[#allocation2 + $0x3]]
    %v74 = vstv %s73
    %v75 = vmul.f32 %v71, %v74
    %v76 = vmul.f32 %v72, %v74
    %v77 = vadd.f32 %v69, %v75
    %v78 = vadd.f32 %v70, %v76
    %v79 = vld [vmem:[%s0 + $0x4] sm:$0x1]
    %v80 = vld [vmem:[%s0 + $0xc] sm:$0x1]
    %s81 = sld [smem:[#allocation2 + $0x4]]
    %v82 = vstv %s81
    %v83 = vmul.f32 %v79, %v82
    %v84 = vmul.f32 %v80, %v82
    %v85 = vadd.f32 %v77, %v83
    %v86 = vadd.f32 %v78, %v84
    %v87 = vld [vmem:[%s0 + $0x5] sm:$0x1]
    %v88 = vld [vmem:[%s0 + $0xd] sm:$0x1]
    %s89 = sld [smem:[#allocation2 + $0x5]]
    %v90 = vstv %s89
    %v91 = vmul.f32 %v87, %v90
    %v92 = vmul.f32 %v88, %v90
    %v93 = vadd.f32 %v85, %v91
    %v94 = vadd.f32 %v86, %v92
    %v95 = vld [vmem:[%s0 + $0x6] sm:$0x1]
    %v96 = vld [vmem:[%s0 + $0xe] sm:$0x1]
    %s97 = sld [smem:[#allocation2 + $0x6]]
    %v98 = vstv %s97
    %v99 = vmul.f32 %v95, %v98
    %v100 = vmul.f32 %v96, %v98
    %v101 = vadd.f32 %v93, %v99
    %v102 = vadd.f32 %v94, %v100
    %v105 = vrot.slane %v102, 7
    %vm106 = vcmask 1041409
    %v107 = vsel %vm106, %v105, %v101
    %vm109 = vcmask 58368
    %v110 = vsel %vm109, %v107, -inf
    %111 = vmax.xlane.f32.xlu0 %v110
    %v112 = vpop.xlane.xlu0 %111
    %v114 = vrot.slane %v112, 1
    %v117 = vsub.f32 %v101, %v112
    %v118 = vsub.f32 %v102, %v114
    %v119 = vmul.f32 %v117, 1.442695
    %v120 = vpow.pop %v119
    %v121 = vmul.f32 %v118, 1.442695
    %v122 = vpow.pop %v121
    %v125 = vrot.slane %v122, 7
    %v126 = vsel %vm106, %v125, %v120
    %v128 = vsel %vm109, %v126, 0.0
    %129 = vadd.xlane.f32.xlu0 %v128
    %v130 = vpop.xlane.xlu0 %129
    %v131 = vrcp.pop %v130
    %v132 = vmul.f32 %v130, %v131
    %v133 = vsub.f32 2.0, %v132
    %v134 = vmul.f32 %v131, %v133
    %v136 = vrot.slane %v134, 1
    %v139 = vmul.f32 %v120, %v134
    %v140 = vmul.f32 %v122, %v136
    %v141 = vmul.f32 %v139, %v49
    %v142 = vmul.f32 %v140, %v50
    %v143 = vmul.f32 %v139, %v55
    %v144 = vmul.f32 %v140, %v56
    %v145 = vmul.f32 %v139, %v63
    %v146 = vmul.f32 %v140, %v64
    %v147 = vmul.f32 %v139, %v71
    %v148 = vmul.f32 %v140, %v72
    %v149 = vmul.f32 %v139, %v79
    %v150 = vmul.f32 %v140, %v80
    %v151 = vmul.f32 %v139, %v87
    %v152 = vmul.f32 %v140, %v88
    %v153 = vmul.f32 %v139, %v95
    %v154 = vmul.f32 %v140, %v96
    %v157 = vrot.slane %v143, 7
    %v158 = vrot.slane %v144, 7
    %v163 = vrot.slane %v145, 6
    %v164 = vrot.slane %v146, 6
    %v169 = vrot.slane %v147, 5
    %v170 = vrot.slane %v148, 5
    %v175 = vrot.slane %v149, 4
    %v176 = vrot.slane %v150, 4
    %v181 = vrot.slane %v151, 3
    %v182 = vrot.slane %v152, 3
    %v187 = vrot.slane %v153, 2
    %v188 = vrot.slane %v154, 2
    %vm191 = vcmask 1040384
    %v192 = vsel %vm191, %v141, %v157
    %v193 = vsel %vm191, %v142, %v158
    %vm194 = vcmask 1041408
    %v195 = vsel %vm194, %v192, %v163
    %v196 = vsel %vm194, %v193, %v164
    %vm197 = vcmask 1042432
    %v198 = vsel %vm197, %v195, %v169
    %v199 = vsel %vm197, %v196, %v170
    %vm200 = vcmask 1043456
    %v201 = vsel %vm200, %v198, %v175
    %v202 = vsel %vm200, %v199, %v176
    %vm203 = vcmask 1044480
    %v204 = vsel %vm203, %v201, %v181
    %v205 = vsel %vm203, %v202, %v182
    %vm206 = vcmask 1045504
    %v207 = vsel %vm206, %v204, %v187
    %v208 = vsel %vm206, %v205, %v188
    %vm209 = vcmask 63488
    %210 = vst.msk [vmem:[%s5] sm:$0x7f] %vm209, %v207
    %211 = vst.msk [vmem:[%s5 + $0x8] sm:$0x7f] %vm209, %v208
    %v212 = vld [vmem:[%s4] sm:$0x1]
    %v213 = vld [vmem:[#allocation5] sm:$0xff]
    %v215 = vperm.slane %v212, 0
    %v219 = vrot.slane %v142, 7
    %v220 = vsel %vm106, %v219, %v141
    %vm221 = vcmask 64512
    %v222 = vsel %vm221, %v220, 0
    %224 = vmatpush.msra.mxu0 0.0
    %225 = vmatpush.msra.mxu0 0.0
    %226 = vmatpush.msra.mxu0 0.0
    %227 = vmatpush.msra.mxu0 0.0
    %228 = vmatpush.msra.mxu0 0.0
    %229 = vmatpush.msra.mxu0 0.0
    %230 = vmatpush.msra.mxu0 0.0
    %231 = vmatpush.msra.mxu0 0.0
    %232 = vmatpush.msra.mxu0 0.0
    %233 = vmatpush.msra.mxu0 0.0
    %234 = vmatpush.msra.mxu0 0.0
    %235 = vmatpush.msra.mxu0 0.0
    %236 = vmatpush.msra.mxu0 0.0
    %237 = vmatpush.msra.mxu0 0.0
    %238 = vmatpush.msra.mxu0 0.0
    %239 = vmatpush.msra.mxu0 %v213
    %240 = vmatmul.f32.gmra.mxu0 %v222
    %v241 = vpop.f32.mrf.mxu0
    %v242 = vadd.f32 %v215, %v241
    %243 = vdwg.mxu0
    %v244 = vsel %vm106, %v158, %v143
    %v245 = vsel %vm221, %v244, 0
    %247 = vmatpush.msra.mxu0 0.0
    %248 = vmatpush.msra.mxu0 0.0
    %249 = vmatpush.msra.mxu0 0.0
    %250 = vmatpush.msra.mxu0 0.0
    %251 = vmatpush.msra.mxu0 0.0
    %252 = vmatpush.msra.mxu0 0.0
    %253 = vmatpush.msra.mxu0 0.0
    %254 = vmatpush.msra.mxu0 0.0
    %255 = vmatpush.msra.mxu0 0.0
    %256 = vmatpush.msra.mxu0 0.0
    %257 = vmatpush.msra.mxu0 0.0
    %258 = vmatpush.msra.mxu0 0.0
    %259 = vmatpush.msra.mxu0 0.0
    %260 = vmatpush.msra.mxu0 0.0
    %261 = vmatpush.msra.mxu0 0.0
    %262 = vmatpush.msra.mxu0 %v213
    %263 = vmatmul.f32.gmra.mxu0 %v245
    %v264 = vpop.f32.mrf.mxu0
    %v265 = vadd.f32 %v215, %v264
    %266 = vdwg.mxu0
    %v267 = vrot.slane %v146, 7
    %v268 = vsel %vm106, %v267, %v145
    %v269 = vsel %vm221, %v268, 0
    %271 = vmatpush.msra.mxu0 0.0
    %272 = vmatpush.msra.mxu0 0.0
    %273 = vmatpush.msra.mxu0 0.0
    %274 = vmatpush.msra.mxu0 0.0
    %275 = vmatpush.msra.mxu0 0.0
    %276 = vmatpush.msra.mxu0 0.0
    %277 = vmatpush.msra.mxu0 0.0
    %278 = vmatpush.msra.mxu0 0.0
    %279 = vmatpush.msra.mxu0 0.0
    %280 = vmatpush.msra.mxu0 0.0
    %281 = vmatpush.msra.mxu0 0.0
    %282 = vmatpush.msra.mxu0 0.0
    %283 = vmatpush.msra.mxu0 0.0
    %284 = vmatpush.msra.mxu0 0.0
    %285 = vmatpush.msra.mxu0 0.0
    %286 = vmatpush.msra.mxu0 %v213
    %287 = vmatmul.f32.gmra.mxu0 %v269
    %v288 = vpop.f32.mrf.mxu0
    %v289 = vadd.f32 %v215, %v288
    %290 = vdwg.mxu0
    %v291 = vrot.slane %v148, 7
    %v292 = vsel %vm106, %v291, %v147
    %v293 = vsel %vm221, %v292, 0
    %295 = vmatpush.msra.mxu0 0.0
    %296 = vmatpush.msra.mxu0 0.0
    %297 = vmatpush.msra.mxu0 0.0
    %298 = vmatpush.msra.mxu0 0.0
    %299 = vmatpush.msra.mxu0 0.0
    %300 = vmatpush.msra.mxu0 0.0
    %301 = vmatpush.msra.mxu0 0.0
    %302 = vmatpush.msra.mxu0 0.0
    %303 = vmatpush.msra.mxu0 0.0
    %304 = vmatpush.msra.mxu0 0.0
    %305 = vmatpush.msra.mxu0 0.0
    %306 = vmatpush.msra.mxu0 0.0
    %307 = vmatpush.msra.mxu0 0.0
    %308 = vmatpush.msra.mxu0 0.0
    %309 = vmatpush.msra.mxu0 0.0
    %310 = vmatpush.msra.mxu0 %v213
    %311 = vmatmul.f32.gmra.mxu0 %v293
    %v312 = vpop.f32.mrf.mxu0
    %v313 = vadd.f32 %v215, %v312
    %314 = vdwg.mxu0
    %v315 = vrot.slane %v150, 7
    %v316 = vsel %vm106, %v315, %v149
    %v317 = vsel %vm221, %v316, 0
    %319 = vmatpush.msra.mxu0 0.0
    %320 = vmatpush.msra.mxu0 0.0
    %321 = vmatpush.msra.mxu0 0.0
    %322 = vmatpush.msra.mxu0 0.0
    %323 = vmatpush.msra.mxu0 0.0
    %324 = vmatpush.msra.mxu0 0.0
    %325 = vmatpush.msra.mxu0 0.0
    %326 = vmatpush.msra.mxu0 0.0
    %327 = vmatpush.msra.mxu0 0.0
    %328 = vmatpush.msra.mxu0 0.0
    %329 = vmatpush.msra.mxu0 0.0
    %330 = vmatpush.msra.mxu0 0.0
    %331 = vmatpush.msra.mxu0 0.0
    %332 = vmatpush.msra.mxu0 0.0
    %333 = vmatpush.msra.mxu0 0.0
    %334 = vmatpush.msra.mxu0 %v213
    %335 = vmatmul.f32.gmra.mxu0 %v317
    %v336 = vpop.f32.mrf.mxu0
    %v337 = vadd.f32 %v215, %v336
    %338 = vdwg.mxu0
    %v339 = vrot.slane %v152, 7
    %v340 = vsel %vm106, %v339, %v151
    %v341 = vsel %vm221, %v340, 0
    %343 = vmatpush.msra.mxu0 0.0
    %344 = vmatpush.msra.mxu0 0.0
    %345 = vmatpush.msra.mxu0 0.0
    %346 = vmatpush.msra.mxu0 0.0
    %347 = vmatpush.msra.mxu0 0.0
    %348 = vmatpush.msra.mxu0 0.0
    %349 = vmatpush.msra.mxu0 0.0
    %350 = vmatpush.msra.mxu0 0.0
    %351 = vmatpush.msra.mxu0 0.0
    %352 = vmatpush.msra.mxu0 0.0
    %353 = vmatpush.msra.mxu0 0.0
    %354 = vmatpush.msra.mxu0 0.0
    %355 = vmatpush.msra.mxu0 0.0
    %356 = vmatpush.msra.mxu0 0.0
    %357 = vmatpush.msra.mxu0 0.0
    %358 = vmatpush.msra.mxu0 %v213
    %359 = vmatmul.f32.gmra.mxu0 %v341
    %v360 = vpop.f32.mrf.mxu0
    %v361 = vadd.f32 %v215, %v360
    %362 = vdwg.mxu0
    %v363 = vrot.slane %v154, 7
    %v364 = vsel %vm106, %v363, %v153
    %v365 = vsel %vm221, %v364, 0
    %367 = vmatpush.msra.mxu0 0.0
    %368 = vmatpush.msra.mxu0 0.0
    %369 = vmatpush.msra.mxu0 0.0
    %370 = vmatpush.msra.mxu0 0.0
    %371 = vmatpush.msra.mxu0 0.0
    %372 = vmatpush.msra.mxu0 0.0
    %373 = vmatpush.msra.mxu0 0.0
    %374 = vmatpush.msra.mxu0 0.0
    %375 = vmatpush.msra.mxu0 0.0
    %376 = vmatpush.msra.mxu0 0.0
    %377 = vmatpush.msra.mxu0 0.0
    %378 = vmatpush.msra.mxu0 0.0
    %379 = vmatpush.msra.mxu0 0.0
    %380 = vmatpush.msra.mxu0 0.0
    %381 = vmatpush.msra.mxu0 0.0
    %382 = vmatpush.msra.mxu0 %v213
    %383 = vmatmul.f32.gmra.mxu0 %v365
    %v384 = vpop.f32.mrf.mxu0
    %v385 = vadd.f32 %v215, %v384
    %386 = vdwg.mxu0
    %v387 = vld [vmem:[%s3] sm:$0xff]
    %v388 = vld [vmem:[%s3 + $0x8] sm:$0xff]
    %v389 = vld [vmem:[%s3 + $0x10] sm:$0xff]
    %v390 = vld [vmem:[%s3 + $0x18] sm:$0xff]
    %vm391 = vcmask 261120
    %v393 = vsel %vm391, 0.0, 0
    %395 = vmatpush.msra.mxu0 0.0
    %396 = vmatpush.msra.mxu0 0.0
    %397 = vmatpush.msra.mxu0 0.0
    %398 = vmatpush.msra.mxu0 0.0
    %399 = vmatpush.msra.mxu0 0.0
    %400 = vmatpush.msra.mxu0 0.0
    %401 = vmatpush.msra.mxu0 0.0
    %402 = vmatpush.msra.mxu0 0.0
    %403 = vmatpush.msra.mxu0 0.0
    %404 = vmatpush.msra.mxu0 0.0
    %405 = vmatpush.msra.mxu0 0.0
    %406 = vmatpush.msra.mxu0 0.0
    %407 = vmatpush.msra.mxu0 %v390
    %408 = vmatpush.msra.mxu0 %v389
    %409 = vmatpush.msra.mxu0 %v388
    %410 = vmatpush.msra.mxu0 %v387
    %411 = vmatmul.f32.gmra.mxu0 %v393
    %v412 = vpop.f32.mrf.mxu0
    %v413 = vadd.f32 0.0, %v412
    %414 = vdwg.mxu0
    %v415 = vadd.f32 %v242, %v413
    %v416 = vxor.u32 %v415, 2147483648
    %v417 = vmul.f32 %v416, 1.442695
    %v418 = vpow.pop %v417
    %v419 = vadd.f32 %v418, 1.0
    %v420 = vrcp.pop %v419
    %v421 = vmul.f32 %v419, %v420
    %v422 = vsub.f32 1.0, %v421
    %v423 = vmul.f32 %v420, %v422
    %v424 = vadd.f32 %v420, %v423
    %vm425 = vweird.f32 %v419
    %vm426 = vweird.f32 %v420
    %vm427 = vmor %vm425, %vm426
    %v428 = vsel %vm427, %v420, %v424
    %v429 = vand.u32 2147483647, %v419
    %vm430 = vcmp.eq.f32.partialorder %v429, 8.507059e+37
    %v431 = vand.u32 %v419, 2147483648
    %v432 = vor.u32 1.1754944e-38, %v431
    %v433 = vsel %vm430, %v432, %v428
    %v434 = vmul.f32 1.0, %v433
    %v435 = vtanh.pop %v415
    %v436 = vmul.f32 %v434, 0.0
    %438 = vrot.lane.b32.xlu0 %v435, 64
    %v439 = vpop.permute.xlu0 %438
    %v441 = vmul.f32 %v434, %v439
    %443 = vrot.lane.b32.xlu0 %v441, 32
    %v444 = vpop.permute.xlu0 %443
    %v446 = vadd.f32 %v436, %v444
    %v447 = vtanh.pop %v446
    %449 = vrot.lane.b32.xlu0 %v447, 64
    %v450 = vpop.permute.xlu0 %449
    %v452 = vmul.f32 %v434, %v450
    %454 = vrot.lane.b32.xlu0 %v452, 32
    %v455 = vpop.permute.xlu0 %454
    %v456 = vsel %vm391, %v455, 0
    %458 = vmatpush.msra.mxu0 0.0
    %459 = vmatpush.msra.mxu0 0.0
    %460 = vmatpush.msra.mxu0 0.0
    %461 = vmatpush.msra.mxu0 0.0
    %462 = vmatpush.msra.mxu0 0.0
    %463 = vmatpush.msra.mxu0 0.0
    %464 = vmatpush.msra.mxu0 0.0
    %465 = vmatpush.msra.mxu0 0.0
    %466 = vmatpush.msra.mxu0 0.0
    %467 = vmatpush.msra.mxu0 0.0
    %468 = vmatpush.msra.mxu0 0.0
    %469 = vmatpush.msra.mxu0 0.0
    %470 = vmatpush.msra.mxu0 %v390
    %471 = vmatpush.msra.mxu0 %v389
    %472 = vmatpush.msra.mxu0 %v388
    %473 = vmatpush.msra.mxu0 %v387
    %474 = vmatmul.f32.gmra.mxu0 %v456
    %v475 = vpop.f32.mrf.mxu0
    %v476 = vadd.f32 0.0, %v475
    %477 = vdwg.mxu0
    %v478 = vadd.f32 %v265, %v476
    %v479 = vxor.u32 %v478, 2147483648
    %v480 = vmul.f32 %v479, 1.442695
    %v481 = vpow.pop %v480
    %v482 = vadd.f32 %v481, 1.0
    %v483 = vrcp.pop %v482
    %v484 = vmul.f32 %v482, %v483
    %v485 = vsub.f32 1.0, %v484
    %v486 = vmul.f32 %v483, %v485
    %v487 = vadd.f32 %v483, %v486
    %vm488 = vweird.f32 %v482
    %vm489 = vweird.f32 %v483
    %vm490 = vmor %vm488, %vm489
    %v491 = vsel %vm490, %v483, %v487
    %v492 = vand.u32 2147483647, %v482
    %vm493 = vcmp.eq.f32.partialorder %v492, 8.507059e+37
    %v494 = vand.u32 %v482, 2147483648
    %v495 = vor.u32 1.1754944e-38, %v494
    %v496 = vsel %vm493, %v495, %v491
    %v497 = vmul.f32 1.0, %v496
    %v498 = vtanh.pop %v478
    %v499 = vmul.f32 %v497, %v446
    %501 = vrot.lane.b32.xlu0 %v498, 64
    %v502 = vpop.permute.xlu0 %501
    %v504 = vmul.f32 %v497, %v502
    %506 = vrot.lane.b32.xlu0 %v504, 32
    %v507 = vpop.permute.xlu0 %506
    %v509 = vadd.f32 %v499, %v507
    %v510 = vtanh.pop %v509
    %512 = vrot.lane.b32.xlu0 %v510, 64
    %v513 = vpop.permute.xlu0 %512
    %v515 = vmul.f32 %v497, %v513
    %517 = vrot.lane.b32.xlu0 %v515, 32
    %v518 = vpop.permute.xlu0 %517
    %v519 = vsel %vm391, %v518, 0
    %521 = vmatpush.msra.mxu0 0.0
    %522 = vmatpush.msra.mxu0 0.0
    %523 = vmatpush.msra.mxu0 0.0
    %524 = vmatpush.msra.mxu0 0.0
    %525 = vmatpush.msra.mxu0 0.0
    %526 = vmatpush.msra.mxu0 0.0
    %527 = vmatpush.msra.mxu0 0.0
    %528 = vmatpush.msra.mxu0 0.0
    %529 = vmatpush.msra.mxu0 0.0
    %530 = vmatpush.msra.mxu0 0.0
    %531 = vmatpush.msra.mxu0 0.0
    %532 = vmatpush.msra.mxu0 0.0
    %533 = vmatpush.msra.mxu0 %v390
    %534 = vmatpush.msra.mxu0 %v389
    %535 = vmatpush.msra.mxu0 %v388
    %536 = vmatpush.msra.mxu0 %v387
    %537 = vmatmul.f32.gmra.mxu0 %v519
    %v538 = vpop.f32.mrf.mxu0
    %v539 = vadd.f32 0.0, %v538
    %540 = vdwg.mxu0
    %v541 = vadd.f32 %v289, %v539
    %v542 = vxor.u32 %v541, 2147483648
    %v543 = vmul.f32 %v542, 1.442695
    %v544 = vpow.pop %v543
    %v545 = vadd.f32 %v544, 1.0
    %v546 = vrcp.pop %v545
    %v547 = vmul.f32 %v545, %v546
    %v548 = vsub.f32 1.0, %v547
    %v549 = vmul.f32 %v546, %v548
    %v550 = vadd.f32 %v546, %v549
    %vm551 = vweird.f32 %v545
    %vm552 = vweird.f32 %v546
    %vm553 = vmor %vm551, %vm552
    %v554 = vsel %vm553, %v546, %v550
    %v555 = vand.u32 2147483647, %v545
    %vm556 = vcmp.eq.f32.partialorder %v555, 8.507059e+37
    %v557 = vand.u32 %v545, 2147483648
    %v558 = vor.u32 1.1754944e-38, %v557
    %v559 = vsel %vm556, %v558, %v554
    %v560 = vmul.f32 1.0, %v559
    %v561 = vtanh.pop %v541
    %v562 = vmul.f32 %v560, %v509
    %564 = vrot.lane.b32.xlu0 %v561, 64
    %v565 = vpop.permute.xlu0 %564
    %v567 = vmul.f32 %v560, %v565
    %569 = vrot.lane.b32.xlu0 %v567, 32
    %v570 = vpop.permute.xlu0 %569
    %v572 = vadd.f32 %v562, %v570
    %v573 = vtanh.pop %v572
    %575 = vrot.lane.b32.xlu0 %v573, 64
    %v576 = vpop.permute.xlu0 %575
    %v578 = vmul.f32 %v560, %v576
    %580 = vrot.lane.b32.xlu0 %v578, 32
    %v581 = vpop.permute.xlu0 %580
    %v582 = vsel %vm391, %v581, 0
    %584 = vmatpush.msra.mxu0 0.0
    %585 = vmatpush.msra.mxu0 0.0
    %586 = vmatpush.msra.mxu0 0.0
    %587 = vmatpush.msra.mxu0 0.0
    %588 = vmatpush.msra.mxu0 0.0
    %589 = vmatpush.msra.mxu0 0.0
    %590 = vmatpush.msra.mxu0 0.0
    %591 = vmatpush.msra.mxu0 0.0
    %592 = vmatpush.msra.mxu0 0.0
    %593 = vmatpush.msra.mxu0 0.0
    %594 = vmatpush.msra.mxu0 0.0
    %595 = vmatpush.msra.mxu0 0.0
    %596 = vmatpush.msra.mxu0 %v390
    %597 = vmatpush.msra.mxu0 %v389
    %598 = vmatpush.msra.mxu0 %v388
    %599 = vmatpush.msra.mxu0 %v387
    %600 = vmatmul.f32.gmra.mxu0 %v582
    %v601 = vpop.f32.mrf.mxu0
    %v602 = vadd.f32 0.0, %v601
    %603 = vdwg.mxu0
    %v604 = vadd.f32 %v313, %v602
    %v605 = vxor.u32 %v604, 2147483648
    %v606 = vmul.f32 %v605, 1.442695
    %v607 = vpow.pop %v606
    %v608 = vadd.f32 %v607, 1.0
    %v609 = vrcp.pop %v608
    %v610 = vmul.f32 %v608, %v609
    %v611 = vsub.f32 1.0, %v610
    %v612 = vmul.f32 %v609, %v611
    %v613 = vadd.f32 %v609, %v612
    %vm614 = vweird.f32 %v608
    %vm615 = vweird.f32 %v609
    %vm616 = vmor %vm614, %vm615
    %v617 = vsel %vm616, %v609, %v613
    %v618 = vand.u32 2147483647, %v608
    %vm619 = vcmp.eq.f32.partialorder %v618, 8.507059e+37
    %v620 = vand.u32 %v608, 2147483648
    %v621 = vor.u32 1.1754944e-38, %v620
    %v622 = vsel %vm619, %v621, %v617
    %v623 = vmul.f32 1.0, %v622
    %v624 = vtanh.pop %v604
    %v625 = vmul.f32 %v623, %v572
    %627 = vrot.lane.b32.xlu0 %v624, 64
    %v628 = vpop.permute.xlu0 %627
    %v630 = vmul.f32 %v623, %v628
    %632 = vrot.lane.b32.xlu0 %v630, 32
    %v633 = vpop.permute.xlu0 %632
    %v635 = vadd.f32 %v625, %v633
    %v636 = vtanh.pop %v635
    %638 = vrot.lane.b32.xlu0 %v636, 64
    %v639 = vpop.permute.xlu0 %638
    %v641 = vmul.f32 %v623, %v639
    %643 = vrot.lane.b32.xlu0 %v641, 32
    %v644 = vpop.permute.xlu0 %643
    %v645 = vsel %vm391, %v644, 0
    %647 = vmatpush.msra.mxu0 0.0
    %648 = vmatpush.msra.mxu0 0.0
    %649 = vmatpush.msra.mxu0 0.0
    %650 = vmatpush.msra.mxu0 0.0
    %651 = vmatpush.msra.mxu0 0.0
    %652 = vmatpush.msra.mxu0 0.0
    %653 = vmatpush.msra.mxu0 0.0
    %654 = vmatpush.msra.mxu0 0.0
    %655 = vmatpush.msra.mxu0 0.0
    %656 = vmatpush.msra.mxu0 0.0
    %657 = vmatpush.msra.mxu0 0.0
    %658 = vmatpush.msra.mxu0 0.0
    %659 = vmatpush.msra.mxu0 %v390
    %660 = vmatpush.msra.mxu0 %v389
    %661 = vmatpush.msra.mxu0 %v388
    %662 = vmatpush.msra.mxu0 %v387
    %663 = vmatmul.f32.gmra.mxu0 %v645
    %v664 = vpop.f32.mrf.mxu0
    %v665 = vadd.f32 0.0, %v664
    %666 = vdwg.mxu0
    %v667 = vadd.f32 %v337, %v665
    %v668 = vxor.u32 %v667, 2147483648
    %v669 = vmul.f32 %v668, 1.442695
    %v670 = vpow.pop %v669
    %v671 = vadd.f32 %v670, 1.0
    %v672 = vrcp.pop %v671
    %v673 = vmul.f32 %v671, %v672
    %v674 = vsub.f32 1.0, %v673
    %v675 = vmul.f32 %v672, %v674
    %v676 = vadd.f32 %v672, %v675
    %vm677 = vweird.f32 %v671
    %vm678 = vweird.f32 %v672
    %vm679 = vmor %vm677, %vm678
    %v680 = vsel %vm679, %v672, %v676
    %v681 = vand.u32 2147483647, %v671
    %vm682 = vcmp.eq.f32.partialorder %v681, 8.507059e+37
    %v683 = vand.u32 %v671, 2147483648
    %v684 = vor.u32 1.1754944e-38, %v683
    %v685 = vsel %vm682, %v684, %v680
    %v686 = vmul.f32 1.0, %v685
    %v687 = vtanh.pop %v667
    %v688 = vmul.f32 %v686, %v635
    %690 = vrot.lane.b32.xlu0 %v687, 64
    %v691 = vpop.permute.xlu0 %690
    %v693 = vmul.f32 %v686, %v691
    %695 = vrot.lane.b32.xlu0 %v693, 32
    %v696 = vpop.permute.xlu0 %695
    %v698 = vadd.f32 %v688, %v696
    %v699 = vtanh.pop %v698
    %701 = vrot.lane.b32.xlu0 %v699, 64
    %v702 = vpop.permute.xlu0 %701
    %v704 = vmul.f32 %v686, %v702
    %706 = vrot.lane.b32.xlu0 %v704, 32
    %v707 = vpop.permute.xlu0 %706
    %v708 = vsel %vm391, %v707, 0
    %710 = vmatpush.msra.mxu0 0.0
    %711 = vmatpush.msra.mxu0 0.0
    %712 = vmatpush.msra.mxu0 0.0
    %713 = vmatpush.msra.mxu0 0.0
    %714 = vmatpush.msra.mxu0 0.0
    %715 = vmatpush.msra.mxu0 0.0
    %716 = vmatpush.msra.mxu0 0.0
    %717 = vmatpush.msra.mxu0 0.0
    %718 = vmatpush.msra.mxu0 0.0
    %719 = vmatpush.msra.mxu0 0.0
    %720 = vmatpush.msra.mxu0 0.0
    %721 = vmatpush.msra.mxu0 0.0
    %722 = vmatpush.msra.mxu0 %v390
    %723 = vmatpush.msra.mxu0 %v389
    %724 = vmatpush.msra.mxu0 %v388
    %725 = vmatpush.msra.mxu0 %v387
    %726 = vmatmul.f32.gmra.mxu0 %v708
    %v727 = vpop.f32.mrf.mxu0
    %v728 = vadd.f32 0.0, %v727
    %729 = vdwg.mxu0
    %v730 = vadd.f32 %v361, %v728
    %v731 = vxor.u32 %v730, 2147483648
    %v732 = vmul.f32 %v731, 1.442695
    %v733 = vpow.pop %v732
    %v734 = vadd.f32 %v733, 1.0
    %v735 = vrcp.pop %v734
    %v736 = vmul.f32 %v734, %v735
    %v737 = vsub.f32 1.0, %v736
    %v738 = vmul.f32 %v735, %v737
    %v739 = vadd.f32 %v735, %v738
    %vm740 = vweird.f32 %v734
    %vm741 = vweird.f32 %v735
    %vm742 = vmor %vm740, %vm741
    %v743 = vsel %vm742, %v735, %v739
    %v744 = vand.u32 2147483647, %v734
    %vm745 = vcmp.eq.f32.partialorder %v744, 8.507059e+37
    %v746 = vand.u32 %v734, 2147483648
    %v747 = vor.u32 1.1754944e-38, %v746
    %v748 = vsel %vm745, %v747, %v743
    %v749 = vmul.f32 1.0, %v748
    %v750 = vtanh.pop %v730
    %v751 = vmul.f32 %v749, %v698
    %753 = vrot.lane.b32.xlu0 %v750, 64
    %v754 = vpop.permute.xlu0 %753
    %v756 = vmul.f32 %v749, %v754
    %758 = vrot.lane.b32.xlu0 %v756, 32
    %v759 = vpop.permute.xlu0 %758
    %v761 = vadd.f32 %v751, %v759
    %v762 = vtanh.pop %v761
    %764 = vrot.lane.b32.xlu0 %v762, 64
    %v765 = vpop.permute.xlu0 %764
    %v767 = vmul.f32 %v749, %v765
    %769 = vrot.lane.b32.xlu0 %v767, 32
    %v770 = vpop.permute.xlu0 %769
    %v771 = vsel %vm391, %v770, 0
    %773 = vmatpush.msra.mxu0 0.0
    %774 = vmatpush.msra.mxu0 0.0
    %775 = vmatpush.msra.mxu0 0.0
    %776 = vmatpush.msra.mxu0 0.0
    %777 = vmatpush.msra.mxu0 0.0
    %778 = vmatpush.msra.mxu0 0.0
    %779 = vmatpush.msra.mxu0 0.0
    %780 = vmatpush.msra.mxu0 0.0
    %781 = vmatpush.msra.mxu0 0.0
    %782 = vmatpush.msra.mxu0 0.0
    %783 = vmatpush.msra.mxu0 0.0
    %784 = vmatpush.msra.mxu0 0.0
    %785 = vmatpush.msra.mxu0 %v390
    %786 = vmatpush.msra.mxu0 %v389
    %787 = vmatpush.msra.mxu0 %v388
    %788 = vmatpush.msra.mxu0 %v387
    %789 = vmatmul.f32.gmra.mxu0 %v771
    %v790 = vpop.f32.mrf.mxu0
    %v791 = vadd.f32 0.0, %v790
    %792 = vdwg.mxu0
    %v793 = vadd.f32 %v385, %v791
    %v794 = vxor.u32 %v793, 2147483648
    %v795 = vmul.f32 %v794, 1.442695
    %v796 = vpow.pop %v795
    %v797 = vadd.f32 %v796, 1.0
    %v798 = vrcp.pop %v797
    %v799 = vmul.f32 %v797, %v798
    %v800 = vsub.f32 1.0, %v799
    %v801 = vmul.f32 %v798, %v800
    %v802 = vadd.f32 %v798, %v801
    %vm803 = vweird.f32 %v797
    %vm804 = vweird.f32 %v798
    %vm805 = vmor %vm803, %vm804
    %v806 = vsel %vm805, %v798, %v802
    %v807 = vand.u32 2147483647, %v797
    %vm808 = vcmp.eq.f32.partialorder %v807, 8.507059e+37
    %v809 = vand.u32 %v797, 2147483648
    %v810 = vor.u32 1.1754944e-38, %v809
    %v811 = vsel %vm808, %v810, %v806
    %v812 = vmul.f32 1.0, %v811
    %v813 = vtanh.pop %v793
    %v814 = vmul.f32 %v812, %v761
    %816 = vrot.lane.b32.xlu0 %v813, 64
    %v817 = vpop.permute.xlu0 %816
    %v819 = vmul.f32 %v812, %v817
    %821 = vrot.lane.b32.xlu0 %v819, 32
    %v822 = vpop.permute.xlu0 %821
    %v824 = vadd.f32 %v814, %v822
    %v825 = vtanh.pop %v824
    %827 = vrot.lane.b32.xlu0 %v825, 64
    %v828 = vpop.permute.xlu0 %827
    %v830 = vmul.f32 %v812, %v828
    %v831 = vrot.slane %v452, 1
    %v833 = vrot.slane %v515, 1
    %v834 = vrot.slane %v578, 1
    %v835 = vrot.slane %v641, 1
    %v836 = vrot.slane %v704, 1
    %v837 = vrot.slane %v767, 1
    %v839 = vrot.slane %v830, 1
    %v840 = vperm.slane %v515, 0
    %v841 = vperm.slane %v833, 0
    %v844 = vperm.slane %v578, 0
    %v845 = vperm.slane %v834, 0
    %v848 = vperm.slane %v641, 0
    %v849 = vperm.slane %v835, 0
    %v852 = vperm.slane %v704, 0
    %v853 = vperm.slane %v836, 0
    %v856 = vperm.slane %v767, 0
    %v857 = vperm.slane %v837, 0
    %v860 = vperm.slane %v830, 0
    %v861 = vperm.slane %v839, 0
    %v864 = vsel %vm191, %v452, %v840
    %v865 = vsel %vm191, %v831, %v841
    %v866 = vsel %vm194, %v864, %v844
    %v867 = vsel %vm194, %v865, %v845
    %v868 = vsel %vm197, %v866, %v848
    %v869 = vsel %vm197, %v867, %v849
    %v870 = vsel %vm200, %v868, %v852
    %v871 = vsel %vm200, %v869, %v853
    %v872 = vsel %vm203, %v870, %v856
    %v873 = vsel %vm203, %v871, %v857
    %v874 = vsel %vm206, %v872, %v860
    %v875 = vsel %vm206, %v873, %v861
    %878 = vrot.lane.b32.xlu0 %v874, 32
    %v879 = vpop.permute.xlu0 %878
    %880 = vrot.lane.b32.xlu0 %v875, 32
    %v881 = vpop.permute.xlu0 %880
    %vm884 = vcmask 260096
    %885 = vst.msk [vmem:[%s6] sm:$0x7f] %vm884, %v879
    %886 = vst.msk [vmem:[%s6 + $0x8] sm:$0x7f] %vm884, %v881
    // Predicated region
    $region30: #{tpu_custom_call.1} parent=1 // pred_check
      _
    $region31: #{tpu_custom_call.1} parent=1 // pred_check_branch
      %888 = sbr.rel (0) target = $region33
    $region32: #{tpu_custom_call.1} parent=1 // pred_region
      _
    $region33: #{tpu_custom_call.1} parent=1 // pred_fallthru
      _
    // Predicated region
    $region34: #{tpu_custom_call.1} parent=1 // pred_check
      _
    $region35: #{tpu_custom_call.1} parent=1 // pred_check_branch
      %890 = sbr.rel (0) target = $region37
    $region36: #{tpu_custom_call.1} parent=1 // pred_region
      _
    $region37: #{tpu_custom_call.1} parent=1 // pred_fallthru
      _
    // Predicated region
    $region38: #{tpu_custom_call.1} parent=1 // pred_check
      _
    $region39: #{tpu_custom_call.1} parent=1 // pred_check_branch
      %892 = sbr.rel (0) target = $region41
    $region40: #{tpu_custom_call.1} parent=1 // pred_region
      _
    $region41: #{tpu_custom_call.1} parent=1 // pred_fallthru
      _
    // Predicated region
    $region42: #{tpu_custom_call.1} parent=1 // pred_check
      _
    $region43: #{tpu_custom_call.1} parent=1 // pred_check_branch
      %894 = sbr.rel (0) target = $region45
    $region44: #{tpu_custom_call.1} parent=1 // pred_region
      _
    $region45: #{tpu_custom_call.1} parent=1 // pred_fallthru
      _
    %895 = vsyncpa [#allocation3], 1
    %896 = vsyncpa [#allocation4], 1

</llo_original>
